<compile_context>
chip_gen: v7x
topology: tpu7x:2x2x1
jax: 0.10.0
libtpu: 0.0.40
codegen_flags: <defaults>
</compile_context>

<pallas_src>
import functools

import jax
import jax.numpy as jnp
from jax.experimental import pallas as pl
from jax.experimental.pallas import tpu as pltpu


def _round_up(x, m):
    return ((x + m - 1) // m) * m


# ---------------------------------------------------------------------------
# Branch 1: integer ids -> embedding row lookup (nn.Embedding).
# ---------------------------------------------------------------------------

_ONEHOT_ROWS = 128            # tokens per grid step, VMEM-resident-table path
_DMA_ROWS = 64                # tokens per grid step, HBM DMA-gather path
_VMEM_TABLE_BYTES = 2 << 20   # fast-path threshold (comfortable on v5e..v7x)


def _onehot_lookup_kernel(ids_ref, emb_ref, out_ref):
    """VMEM-resident table: gather rows via a one-hot MXU matmul."""
    ids = ids_ref[...]                                   # (ROWS, 1) int32
    rows, _ = ids.shape
    v = emb_ref.shape[0]
    onehot = (ids == jax.lax.broadcasted_iota(jnp.int32, (rows, v), 1)
              ).astype(jnp.float32)
    # HIGHEST precision -> the one-hot selection reconstructs f32 rows exactly.
    out_ref[...] = jnp.dot(onehot, emb_ref[...].astype(jnp.float32),
                           precision=jax.lax.Precision.HIGHEST,
                           preferred_element_type=jnp.float32
                           ).astype(out_ref.dtype)


def _dma_lookup_kernel(ids_ref, emb_hbm, out_ref, sems):
    """HBM table: per-row async DMAs straight into the output block."""
    base = pl.program_id(0) * _DMA_ROWS
    copies = []
    for r in range(_DMA_ROWS):
        row = ids_ref[base + r]
        cp = pltpu.make_async_copy(emb_hbm.at[pl.ds(row, 1), :],
                                   out_ref.at[pl.ds(r, 1), :],
                                   sems.at[r])
        cp.start()
        copies.append(cp)
    for cp in copies:          # wait on the very descriptors that were started
        cp.wait()


def embedding_lookup(ids, emb_weight, *, vmem_table=None):
    """ids: int array [...]; emb_weight: (V, E). Returns ids.shape + (E,)."""
    V, E = emb_weight.shape
    lead_shape = ids.shape
    flat = ids.reshape(-1).astype(jnp.int32)
    n = flat.shape[0]

    if vmem_table is None:
        table_bytes = V * E * jnp.dtype(emb_weight.dtype).itemsize
        vmem_table = table_bytes <= _VMEM_TABLE_BYTES and V <= 4096

    if vmem_table:
        rows = _ONEHOT_ROWS
        n_pad = _round_up(n, rows)
        if n_pad != n:
            flat = jnp.pad(flat, (0, n_pad - n))       # padded ids -> row 0
        ids2d = flat.reshape(n_pad, 1)
        out = pl.pallas_call(
            _onehot_lookup_kernel,
            out_shape=jax.ShapeDtypeStruct((n_pad, E), emb_weight.dtype),
            grid=(n_pad // rows,),
            in_specs=[pl.BlockSpec((rows, 1), lambda i: (i, 0)),
                      pl.BlockSpec((V, E), lambda i: (0, 0))],  # resident table
            out_specs=pl.BlockSpec((rows, E), lambda i: (i, 0)),
            compiler_params=pltpu.CompilerParams(
                dimension_semantics=("parallel",)),
        )(ids2d, emb_weight)
    else:
        rows = _DMA_ROWS
        n_pad = _round_up(n, rows)
        if n_pad != n:
            flat = jnp.pad(flat, (0, n_pad - n))       # padded ids -> row 0
        out = pl.pallas_call(
            _dma_lookup_kernel,
            out_shape=jax.ShapeDtypeStruct((n_pad, E), emb_weight.dtype),
            grid_spec=pltpu.PrefetchScalarGridSpec(
                num_scalar_prefetch=1,                     # token ids -> SMEM
                grid=(n_pad // rows,),
                in_specs=[pl.BlockSpec(memory_space=pl.ANY)],  # table in HBM
                out_specs=pl.BlockSpec((rows, E), lambda i, ids: (i, 0)),
                scratch_shapes=[pltpu.SemaphoreType.DMA((rows,))]),
            compiler_params=pltpu.CompilerParams(
                dimension_semantics=("parallel",)),
        )(flat, emb_weight)

    return out[:n].reshape(*lead_shape, E)


# ---------------------------------------------------------------------------
# Branch 2: float mask [..., V] @ embedding weight (V, E) -- tiled MXU matmul.
# ---------------------------------------------------------------------------

def _matmul_kernel_simple(x_ref, w_ref, o_ref):
    o_ref[...] = jnp.dot(x_ref[...], w_ref[...],
                         preferred_element_type=jnp.float32).astype(o_ref.dtype)


def _matmul_kernel_acc(x_ref, w_ref, o_ref, acc_ref, *, tk, k_valid):
    k = pl.program_id(2)

    @pl.when(k == 0)
    def _():
        acc_ref[...] = jnp.zeros_like(acc_ref)

    x = x_ref[...]
    w = w_ref[...]
    if k_valid is not None:
        # Ragged reduction dim: zero both operand tails of the boundary block
        # (in-kernel masking instead of an XLA-side jnp.pad HBM copy).
        rem = k_valid - k * tk
        xm = jax.lax.broadcasted_iota(jnp.int32, (1, tk), 1) < rem
        wm = jax.lax.broadcasted_iota(jnp.int32, (tk, 1), 0) < rem
        x = jnp.where(xm, x, 0)
        w = jnp.where(wm, w, 0)

    acc_ref[...] += jnp.dot(x, w, preferred_element_type=jnp.float32)

    @pl.when(k == pl.num_programs(2) - 1)
    def _():
        o_ref[...] = acc_ref[...].astype(o_ref.dtype)


def _matmul_embedding(x, w, *, tm_cap=256, tn_cap=256, tk_cap=2048):
    """x: (M, V) float, w: (V, E) -> (M, E)."""
    M, K = x.shape
    Kw, N = w.shape
    assert K == Kw
    out_dtype = jnp.promote_types(x.dtype, w.dtype)

    # DEFAULT MXU precision rounds operands to bf16 anyway; casting up front
    # halves HBM traffic for this memory-bound matmul.  Accumulation stays f32.
    xb = x.astype(jnp.bfloat16)
    wb = w.astype(jnp.bfloat16)

    tm = min(tm_cap, _round_up(M, 8))
    tn = N if N <= 128 else min(tn_cap, _round_up(N, 128))
    tk = K if K <= tk_cap else tk_cap
    gm, gn, nk = pl.cdiv(M, tm), pl.cdiv(N, tn), pl.cdiv(K, tk)

    if nk == 1:
        # Single reduction block: skip the f32 accumulator round-trip.
        return pl.pallas_call(
            _matmul_kernel_simple,
            out_shape=jax.ShapeDtypeStruct((M, N), out_dtype),
            grid=(gm, gn),
            in_specs=[pl.BlockSpec((tm, tk), lambda i, j: (i, 0)),
                      pl.BlockSpec((tk, tn), lambda i, j: (0, j))],
            out_specs=pl.BlockSpec((tm, tn), lambda i, j: (i, j)),
            compiler_params=pltpu.CompilerParams(
                dimension_semantics=("parallel", "parallel")),
        )(xb, wb)

    k_valid = K if K % tk else None
    kernel = functools.partial(_matmul_kernel_acc, tk=tk, k_valid=k_valid)
    return pl.pallas_call(
        kernel,
        out_shape=jax.ShapeDtypeStruct((M, N), out_dtype),
        grid=(gm, gn, nk),
        in_specs=[pl.BlockSpec((tm, tk), lambda i, j, k: (i, k)),
                  pl.BlockSpec((tk, tn), lambda i, j, k: (k, j))],
        out_specs=pl.BlockSpec((tm, tn), lambda i, j, k: (i, j)),
        scratch_shapes=[pltpu.VMEM((tm, tn), jnp.float32)],
        compiler_params=pltpu.CompilerParams(
            dimension_semantics=("parallel", "parallel", "arbitrary")),
    )(xb, wb)


# ---------------------------------------------------------------------------
# Module forward (matches Embedding_.forward dispatch).
# ---------------------------------------------------------------------------

def embedding_forward(mask, emb_weight):
    # TODO(synk): the original module's `.cuda()` placement has no JAX analog.
    if mask.ndim == 2:
        assert jnp.issubdtype(mask.dtype, jnp.integer), "2-D mask must be token ids"
        return embedding_lookup(mask, emb_weight)
    assert jnp.issubdtype(mask.dtype, jnp.floating), "non-2-D mask must be float"
    V, E = emb_weight.shape
    lead = mask.shape[:-1]
    out2d = _matmul_embedding(mask.reshape(-1, V), emb_weight)
    return out2d.reshape(*lead, E)


if __name__ == "__main__":
    V, E = 50, 32      # vocab size, embedding dim
    T, B = 8, 4        # seq len, batch

    key = jax.random.PRNGKey(0)
    k_w, k_w2, k_ids, k_ids2, k_mask, k_mask2 = jax.random.split(key, 6)

    emb_weight = jax.random.normal(k_w, (V, E), jnp.float32)

    # --- integer-id branch, VMEM-resident one-hot fast path -----------------
    ids = jax.random.randint(k_ids, (T, B), 0, V, dtype=jnp.int32)
    out_lookup = jax.jit(embedding_forward)(ids, emb_weight)
    jax.block_until_ready(out_lookup)
    ref_lookup = jnp.take(emb_weight, ids, axis=0)
    assert out_lookup.shape == (T, B, E)
    assert jnp.allclose(out_lookup, ref_lookup, rtol=1e-5, atol=1e-5), \
        "lookup (fast path) mismatch"

    # --- integer-id branch, forced HBM DMA-gather path, ragged token count --
    ids_ragged = jax.random.randint(k_ids2, (5, 3), 0, V, dtype=jnp.int32)
    lookup_dma = jax.jit(lambda i, w: embedding_lookup(i, w, vmem_table=False))
    out_ragged = lookup_dma(ids_ragged, emb_weight)
    jax.block_until_ready(out_ragged)
    assert jnp.allclose(out_ragged, jnp.take(emb_weight, ids_ragged, axis=0)), \
        "lookup (DMA path) mismatch"

    # --- float-mask branch, single-K-block path ------------------------------
    mask = jax.nn.softmax(
        jax.random.normal(k_mask, (T, B, V), jnp.float32), axis=-1)
    out_mm = jax.jit(embedding_forward)(mask, emb_weight)
    jax.block_until_ready(out_mm)
    ref_mm = jnp.einsum("tbv,ve->tbe", mask, emb_weight,
                        precision=jax.lax.Precision.HIGHEST)
    assert out_mm.shape == (T, B, E)
    # bf16 MXU operands vs f32 HIGHEST reference -> loosened tolerance.
    assert jnp.allclose(out_mm, ref_mm, rtol=2e-2, atol=1e-2), "matmul mismatch"

    # --- float-mask branch, forced multi-K / ragged-K accumulator path ------
    V2 = 200
    emb2 = jax.random.normal(k_w2, (V2, E), jnp.float32)
    mask2 = jax.nn.softmax(
        jax.random.normal(k_mask2, (5, 3, V2), jnp.float32), axis=-1)
    mm_forced = jax.jit(
        lambda m, w: _matmul_embedding(m.reshape(-1, V2), w, tk_cap=128))
    out_mm2 = mm_forced(mask2, emb2).reshape(5, 3, E)
    jax.block_until_ready(out_mm2)
    ref_mm2 = jnp.einsum("tbv,ve->tbe", mask2, emb2,
                         precision=jax.lax.Precision.HIGHEST)
    assert jnp.allclose(out_mm2, ref_mm2, rtol=2e-2, atol=1e-2), \
        "matmul (ragged-K) mismatch"

    print("KERNEL_OK")
</pallas_src>

<mosaic_0001>
module attributes {stable_mosaic.version = 11 : i64} {
  func.func @_onehot_lookup_kernel(%arg0: i32, %arg1: memref<128x1xi32, #tpu.memory_space<vmem>>, %arg2: memref<50x32xf32, #tpu.memory_space<vmem>>, %arg3: memref<128x32xf32, #tpu.memory_space<vmem>>) attributes {dimension_semantics = [#tpu.dimension_semantics<parallel>], iteration_bounds = array<i64: 1>, scalar_prefetch = 0 : i64, scratch_operands = 0 : i64, tpu.core_type = #tpu.core_type<tc>, window_params = [{transform_indices = @transform_0, window_bounds = array<i64: 128, 1>}, {pipeline_mode = #tpu.pipeline_mode<synchronous>, transform_indices = @transform_1, window_bounds = array<i64: 50, 32>}, {transform_indices = @transform_2, window_bounds = array<i64: 128, 32>}]} {
    %c0 = arith.constant 0 : index
    %c0_0 = arith.constant 0 : index
    %0 = vector.load %arg1[%c0, %c0_0] : memref<128x1xi32, #tpu.memory_space<vmem>>, vector<128x1xi32>
    %1 = tpu.iota {dimensions = array<i32: 1>} : vector<128x50xi32>
    %2 = vector.broadcast %0 : vector<128x1xi32> to vector<128x50xi32>
    %3 = arith.cmpi eq, %2, %1 : vector<128x50xi32>
    %4 = arith.extui %3 : vector<128x50xi1> to vector<128x50xi32>
    %5 = arith.sitofp %4 : vector<128x50xi32> to vector<128x50xf32>
    %c0_1 = arith.constant 0 : index
    %c0_2 = arith.constant 0 : index
    %6 = vector.load %arg2[%c0_1, %c0_2] : memref<50x32xf32, #tpu.memory_space<vmem>>, vector<50x32xf32>
    %cst = arith.constant dense<0.000000e+00> : vector<128x32xf32>
    %7 = tpu.matmul %5, %6, %cst {dimension_numbers = #tpu.dot_dimension_numbers<[1], [0], [0], [1], [0, 0, 1, 1], [], []>, precision = #tpu.contract_precision<fp32>} : vector<128x50xf32>, vector<50x32xf32>, vector<128x32xf32> -> vector<128x32xf32>
    %c0_3 = arith.constant 0 : index
    %c0_4 = arith.constant 0 : index
    %8 = vector.load %arg3[%c0_3, %c0_4] : memref<128x32xf32, #tpu.memory_space<vmem>>, vector<128x32xf32>
    tpu.vector_store %arg3[%c0_3, %c0_4], %7 {strides = array<i32>} : memref<128x32xf32, #tpu.memory_space<vmem>>, vector<128x32xf32>,
    return
  }
  func.func @transform_0(%arg0: i32) -> (i32, i32) {
    %c0_i32 = arith.constant 0 : i32
    %c0_i32_0 = arith.constant 0 : i32
    return %arg0, %c0_i32 : i32, i32
  }
  func.func @transform_1(%arg0: i32) -> (i32, i32) {
    %c0_i32 = arith.constant 0 : i32
    %c0_i32_0 = arith.constant 0 : i32
    %c0_i32_1 = arith.constant 0 : i32
    return %c0_i32, %c0_i32_0 : i32, i32
  }
  func.func @transform_2(%arg0: i32) -> (i32, i32) {
    %c0_i32 = arith.constant 0 : i32
    %c0_i32_0 = arith.constant 0 : i32
    return %arg0, %c0_i32 : i32, i32
  }
}

</mosaic_0001>

<llo_original>
// kernel: embedding_forward.1
$region0: #{embedding_forward.1}
  #allocation0 [shape = 'u32[]', space=smem, size = 0x4, offset = 0x4, fixed_abs, tag = 'smem constant byte address 0x4 - core index']
  #allocation1 [shape = 'u32[144,128]{1,0:T(1,128)}', space=vmem, size = 0x12000, scoped, tag = 'internal scratch']
  %s0 = inlined_call_operand.vmem [shape: s32[128,1], index: 0, kind: input, shape index: {}]
  %s1 = inlined_call_operand.vmem [shape: f32[50,32], index: 1, kind: input, shape index: {}]
  %s2 = inlined_call_operand.vmem [shape: f32[128,32], index: 2, kind: output, shape index: {}]
  %s3 = sld [smem:[#allocation0]]
  $region18: #{embedding_forward.1} parent=0
    _
  %s5 = ssub.s32 1, %s3
  %s6 = scalar_select 0, %s5, %s3
  // Predicated region
  $region2: #{embedding_forward.1} parent=0 // pred_check
    _
  $region3: #{embedding_forward.1} parent=0 // pred_check_branch
    %8 = sbr.rel (0) target = $region5
  $region4: #{embedding_forward.1} parent=0 // pred_region
    _
  $region5: #{embedding_forward.1} parent=0 // pred_fallthru
    _
  // Predicated region
  $region6: #{embedding_forward.1} parent=0 // pred_check
    _
  $region7: #{embedding_forward.1} parent=0 // pred_check_branch
    %10 = sbr.rel (0) target = $region9
  $region8: #{embedding_forward.1} parent=0 // pred_region
    _
  $region9: #{embedding_forward.1} parent=0 // pred_fallthru
    _
  %v11 = vld [vmem:[%s0] sm:$0xff]
  %v12 = vld [vmem:[%s0 + $0x8] sm:$0xff]
  %v13 = vld [vmem:[%s0 + $0x10] sm:$0xff]
  %v14 = vld [vmem:[%s0 + $0x18] sm:$0xff]
  %v15 = vld [vmem:[%s0 + $0x20] sm:$0xff]
  %v16 = vld [vmem:[%s0 + $0x28] sm:$0xff]
  %v17 = vld [vmem:[%s0 + $0x30] sm:$0xff]
  %v18 = vld [vmem:[%s0 + $0x38] sm:$0xff]
  %v19 = vld [vmem:[%s0 + $0x40] sm:$0xff]
  %v20 = vld [vmem:[%s0 + $0x48] sm:$0xff]
  %v21 = vld [vmem:[%s0 + $0x50] sm:$0xff]
  %v22 = vld [vmem:[%s0 + $0x58] sm:$0xff]
  %v23 = vld [vmem:[%s0 + $0x60] sm:$0xff]
  %v24 = vld [vmem:[%s0 + $0x68] sm:$0xff]
  %v25 = vld [vmem:[%s0 + $0x70] sm:$0xff]
  %v26 = vld [vmem:[%s0 + $0x78] sm:$0xff]
  %v27 = vlaneseq
  %v28 = vand.u32 %v27, 127
  %29 = vset.pattern.permute.xlu0 0
  %30 = vperm.xlu0 %29, %v11
  %v31 = vpop.permute.xlu0 %30
  %32 = vset.pattern.permute.xlu0 0
  %33 = vperm.xlu0 %32, %v12
  %v34 = vpop.permute.xlu0 %33
  %35 = vset.pattern.permute.xlu0 0
  %36 = vperm.xlu0 %35, %v13
  %v37 = vpop.permute.xlu0 %36
  %38 = vset.pattern.permute.xlu0 0
  %39 = vperm.xlu0 %38, %v14
  %v40 = vpop.permute.xlu0 %39
  %41 = vset.pattern.permute.xlu0 0
  %42 = vperm.xlu0 %41, %v15
  %v43 = vpop.permute.xlu0 %42
  %44 = vset.pattern.permute.xlu0 0
  %45 = vperm.xlu0 %44, %v16
  %v46 = vpop.permute.xlu0 %45
  %47 = vset.pattern.permute.xlu0 0
  %48 = vperm.xlu0 %47, %v17
  %v49 = vpop.permute.xlu0 %48
  %50 = vset.pattern.permute.xlu0 0
  %51 = vperm.xlu0 %50, %v18
  %v52 = vpop.permute.xlu0 %51
  %53 = vset.pattern.permute.xlu0 0
  %54 = vperm.xlu0 %53, %v19
  %v55 = vpop.permute.xlu0 %54
  %56 = vset.pattern.permute.xlu0 0
  %57 = vperm.xlu0 %56, %v20
  %v58 = vpop.permute.xlu0 %57
  %59 = vset.pattern.permute.xlu0 0
  %60 = vperm.xlu0 %59, %v21
  %v61 = vpop.permute.xlu0 %60
  %62 = vset.pattern.permute.xlu0 0
  %63 = vperm.xlu0 %62, %v22
  %v64 = vpop.permute.xlu0 %63
  %65 = vset.pattern.permute.xlu0 0
  %66 = vperm.xlu0 %65, %v23
  %v67 = vpop.permute.xlu0 %66
  %68 = vset.pattern.permute.xlu0 0
  %69 = vperm.xlu0 %68, %v24
  %v70 = vpop.permute.xlu0 %69
  %71 = vset.pattern.permute.xlu0 0
  %72 = vperm.xlu0 %71, %v25
  %v73 = vpop.permute.xlu0 %72
  %74 = vset.pattern.permute.xlu0 0
  %75 = vperm.xlu0 %74, %v26
  %v76 = vpop.permute.xlu0 %75
  %vm77 = vcmp.eq.s32.totalorder %v31, %v28
  %vm78 = vcmp.eq.s32.totalorder %v34, %v28
  %vm79 = vcmp.eq.s32.totalorder %v37, %v28
  %vm80 = vcmp.eq.s32.totalorder %v40, %v28
  %vm81 = vcmp.eq.s32.totalorder %v43, %v28
  %vm82 = vcmp.eq.s32.totalorder %v46, %v28
  %vm83 = vcmp.eq.s32.totalorder %v49, %v28
  %vm84 = vcmp.eq.s32.totalorder %v52, %v28
  %vm85 = vcmp.eq.s32.totalorder %v55, %v28
  %vm86 = vcmp.eq.s32.totalorder %v58, %v28
  %vm87 = vcmp.eq.s32.totalorder %v61, %v28
  %vm88 = vcmp.eq.s32.totalorder %v64, %v28
  %vm89 = vcmp.eq.s32.totalorder %v67, %v28
  %vm90 = vcmp.eq.s32.totalorder %v70, %v28
  %vm91 = vcmp.eq.s32.totalorder %v73, %v28
  %vm92 = vcmp.eq.s32.totalorder %v76, %v28
  %v93 = vsel %vm77, 1, 0
  %v94 = vsel %vm78, 1, 0
  %v95 = vsel %vm79, 1, 0
  %v96 = vsel %vm80, 1, 0
  %v97 = vsel %vm81, 1, 0
  %v98 = vsel %vm82, 1, 0
  %v99 = vsel %vm83, 1, 0
  %v100 = vsel %vm84, 1, 0
  %v101 = vsel %vm85, 1, 0
  %v102 = vsel %vm86, 1, 0
  %v103 = vsel %vm87, 1, 0
  %v104 = vsel %vm88, 1, 0
  %v105 = vsel %vm89, 1, 0
  %v106 = vsel %vm90, 1, 0
  %v107 = vsel %vm91, 1, 0
  %v108 = vsel %vm92, 1, 0
  %v109 = vcvt.s32.f32 %v93
  %v110 = vcvt.s32.f32 %v94
  %v111 = vcvt.s32.f32 %v95
  %v112 = vcvt.s32.f32 %v96
  %v113 = vcvt.s32.f32 %v97
  %v114 = vcvt.s32.f32 %v98
  %v115 = vcvt.s32.f32 %v99
  %v116 = vcvt.s32.f32 %v100
  %v117 = vcvt.s32.f32 %v101
  %v118 = vcvt.s32.f32 %v102
  %v119 = vcvt.s32.f32 %v103
  %v120 = vcvt.s32.f32 %v104
  %v121 = vcvt.s32.f32 %v105
  %v122 = vcvt.s32.f32 %v106
  %v123 = vcvt.s32.f32 %v107
  %v124 = vcvt.s32.f32 %v108
  %v125 = vld [vmem:[%s1] sm:$0xff]
  %v126 = vld [vmem:[%s1 + $0x8] sm:$0xff]
  %v127 = vld [vmem:[%s1 + $0x10] sm:$0xff]
  %v128 = vld [vmem:[%s1 + $0x18] sm:$0xff]
  %v129 = vld [vmem:[%s1 + $0x20] sm:$0xff]
  %v130 = vld [vmem:[%s1 + $0x28] sm:$0xff]
  %v131 = vld [vmem:[%s1 + $0x30] sm:$0x3]
  %vm132 = vcmask 408576
  %v134 = vsel %vm132, %v109, 0
  %v137 = vsel %vm132, %v110, 0
  %v140 = vsel %vm132, %v111, 0
  %v143 = vsel %vm132, %v112, 0
  %v146 = vsel %vm132, %v113, 0
  %v149 = vsel %vm132, %v114, 0
  %v152 = vsel %vm132, %v115, 0
  %v155 = vsel %vm132, %v116, 0
  %v158 = vsel %vm132, %v117, 0
  %v161 = vsel %vm132, %v118, 0
  %v164 = vsel %vm132, %v119, 0
  %v167 = vsel %vm132, %v120, 0
  %v170 = vsel %vm132, %v121, 0
  %v173 = vsel %vm132, %v122, 0
  %v176 = vsel %vm132, %v123, 0
  %v179 = vsel %vm132, %v124, 0
  %vm181 = vcmask 1041408
  %v183 = vsel %vm181, %v131, 0
  %185 = vmatprep.subr.mxu0 0.0
  %v186 = vand.u32 %v125, 4294901760
  %187 = vmatpush1.msra.mxu0 %v186
  %188 = vmatprep.subr.mxu0 0.0
  %v189 = vand.u32 %v126, 4294901760
  %190 = vmatpush1.msra.mxu0 %v189
  %191 = vmatprep.subr.mxu0 0.0
  %v192 = vand.u32 %v127, 4294901760
  %193 = vmatpush1.msra.mxu0 %v192
  %194 = vmatprep.subr.mxu0 0.0
  %v195 = vand.u32 %v128, 4294901760
  %196 = vmatpush1.msra.mxu0 %v195
  %197 = vmatprep.subr.mxu0 0.0
  %v198 = vand.u32 %v129, 4294901760
  %199 = vmatpush1.msra.mxu0 %v198
  %200 = vmatprep.subr.mxu0 0.0
  %v201 = vand.u32 %v130, 4294901760
  %202 = vmatpush1.msra.mxu0 %v201
  %203 = vmatprep.subr.mxu0 0.0
  %v204 = vand.u32 %v183, 4294901760
  %205 = vmatpush1.msra.mxu0 %v204
  %206 = vmatprep.subr.mxu0 0.0
  %207 = vmatpush1.msra.mxu0 0.0
  %208 = vmatprep.subr.mxu0 0.0
  %209 = vmatpush1.msra.mxu0 0.0
  %210 = vmatprep.subr.mxu0 0.0
  %211 = vmatpush1.msra.mxu0 0.0
  %212 = vmatprep.subr.mxu0 0.0
  %213 = vmatpush1.msra.mxu0 0.0
  %214 = vmatprep.subr.mxu0 0.0
  %215 = vmatpush1.msra.mxu0 0.0
  %216 = vmatprep.subr.mxu0 0.0
  %217 = vmatpush1.msra.mxu0 0.0
  %218 = vmatprep.subr.mxu0 0.0
  %219 = vmatpush1.msra.mxu0 0.0
  %220 = vmatprep.subr.mxu0 0.0
  %221 = vmatpush1.msra.mxu0 0.0
  %222 = vmatprep.subr.mxu0 0.0
  %223 = vmatpush1.msra.mxu0 0.0
  %224 = vmatprep.subr.mxu0 0.0
  %225 = vmatpush1.msra.mxu0 0.0
  %226 = vmatprep.subr.mxu0 0.0
  %227 = vmatpush1.msra.mxu0 0.0
  %228 = vmatprep.subr.mxu0 0.0
  %229 = vmatpush1.msra.mxu0 0.0
  %230 = vmatprep.subr.mxu0 0.0
  %231 = vmatpush1.msra.mxu0 0.0
  %232 = vmatprep.subr.mxu0 0.0
  %233 = vmatpush1.msra.mxu0 0.0
  %234 = vmatprep.subr.mxu0 0.0
  %235 = vmatpush1.msra.mxu0 0.0
  %236 = vmatprep.subr.mxu0 0.0
  %237 = vmatpush1.msra.mxu0 0.0
  %238 = vmatprep.subr.mxu0 0.0
  %239 = vmatpush1.msra.mxu0 0.0
  %240 = vmatprep.subr.mxu0 0.0
  %241 = vmatpush1.msra.mxu0 0.0
  %242 = vmatprep.subr.mxu0 0.0
  %243 = vmatpush1.msra.mxu0 0.0
  %244 = vmatprep.subr.mxu0 0.0
  %245 = vmatpush1.msra.mxu0 0.0
  %246 = vmatprep.subr.mxu0 0.0
  %247 = vmatpush1.msra.mxu0 0.0
  %248 = vmatprep.subr.mxu0 0.0
  %249 = vmatpush1.msra.mxu0 0.0
  %250 = vmatprep.subr.mxu0 0.0
  %251 = vmatpush1.msra.mxu0 0.0
  %252 = vmatprep.subr.mxu0 0.0
  %253 = vmatpush1.msra.mxu0 0.0
  %254 = vmatprep.subr.mxu0 0.0
  %255 = vmatpush1.msra.mxu0 0.0
  %256 = vmatprep.mubr.f32.mxu0 0.0
  %v257 = vand.u32 %v134, 4294901760
  %v258 = vsub.f32 %v134, %v257
  %v259 = vand.u32 %v258, 4294901760
  %v260 = vsub.f32 %v258, %v259
  %v261 = vand.u32 %v260, 4294901760
  %262 = vmatmul.mubr.f32.gmra.mrb[0].mxu0 %v261
  %v263 = vpop.f32.mrb[0].mxu0
  %v264 = vadd.f32 0.0, %v263
  %v265 = vpop.f32.mrb[0].mxu0
  %266 = vmatprep.mubr.f32.mxu0 0.0
  %v267 = vand.u32 %v137, 4294901760
  %v268 = vsub.f32 %v137, %v267
  %v269 = vand.u32 %v268, 4294901760
  %v270 = vsub.f32 %v268, %v269
  %v271 = vand.u32 %v270, 4294901760
  %272 = vmatmul.mubr.f32.gmra.mrb[0].mxu0 %v271
  %v273 = vpop.f32.mrb[0].mxu0
  %v274 = vadd.f32 0.0, %v273
  %v275 = vpop.f32.mrb[0].mxu0
  %276 = vmatprep.mubr.f32.mxu0 0.0
  %v277 = vand.u32 %v140, 4294901760
  %v278 = vsub.f32 %v140, %v277
  %v279 = vand.u32 %v278, 4294901760
  %v280 = vsub.f32 %v278, %v279
  %v281 = vand.u32 %v280, 4294901760
  %282 = vmatmul.mubr.f32.gmra.mrb[0].mxu0 %v281
  %v283 = vpop.f32.mrb[0].mxu0
  %v284 = vadd.f32 0.0, %v283
  %v285 = vpop.f32.mrb[0].mxu0
  %286 = vmatprep.mubr.f32.mxu0 0.0
  %v287 = vand.u32 %v143, 4294901760
  %v288 = vsub.f32 %v143, %v287
  %v289 = vand.u32 %v288, 4294901760
  %v290 = vsub.f32 %v288, %v289
  %v291 = vand.u32 %v290, 4294901760
  %292 = vmatmul.mubr.f32.gmra.mrb[0].mxu0 %v291
  %v293 = vpop.f32.mrb[0].mxu0
  %v294 = vadd.f32 0.0, %v293
  %v295 = vpop.f32.mrb[0].mxu0
  %296 = vmatprep.mubr.f32.mxu0 0.0
  %v297 = vand.u32 %v146, 4294901760
  %v298 = vsub.f32 %v146, %v297
  %v299 = vand.u32 %v298, 4294901760
  %v300 = vsub.f32 %v298, %v299
  %v301 = vand.u32 %v300, 4294901760
  %302 = vmatmul.mubr.f32.gmra.mrb[0].mxu0 %v301
  %v303 = vpop.f32.mrb[0].mxu0
  %v304 = vadd.f32 0.0, %v303
  %v305 = vpop.f32.mrb[0].mxu0
  %306 = vmatprep.mubr.f32.mxu0 0.0
  %v307 = vand.u32 %v149, 4294901760
  %v308 = vsub.f32 %v149, %v307
  %v309 = vand.u32 %v308, 4294901760
  %v310 = vsub.f32 %v308, %v309
  %v311 = vand.u32 %v310, 4294901760
  %312 = vmatmul.mubr.f32.gmra.mrb[0].mxu0 %v311
  %v313 = vpop.f32.mrb[0].mxu0
  %v314 = vadd.f32 0.0, %v313
  %v315 = vpop.f32.mrb[0].mxu0
  %316 = vmatprep.mubr.f32.mxu0 0.0
  %v317 = vand.u32 %v152, 4294901760
  %v318 = vsub.f32 %v152, %v317
  %v319 = vand.u32 %v318, 4294901760
  %v320 = vsub.f32 %v318, %v319
  %v321 = vand.u32 %v320, 4294901760
  %322 = vmatmul.mubr.f32.gmra.mrb[0].mxu0 %v321
  %v323 = vpop.f32.mrb[0].mxu0
  %v324 = vadd.f32 0.0, %v323
  %v325 = vpop.f32.mrb[0].mxu0
  %326 = vmatprep.mubr.f32.mxu0 0.0
  %v327 = vand.u32 %v155, 4294901760
  %v328 = vsub.f32 %v155, %v327
  %v329 = vand.u32 %v328, 4294901760
  %v330 = vsub.f32 %v328, %v329
  %v331 = vand.u32 %v330, 4294901760
  %332 = vmatmul.mubr.f32.gmra.mrb[0].mxu0 %v331
  %v333 = vpop.f32.mrb[0].mxu0
  %v334 = vadd.f32 0.0, %v333
  %v335 = vpop.f32.mrb[0].mxu0
  %336 = vmatprep.mubr.f32.mxu0 0.0
  %v337 = vand.u32 %v158, 4294901760
  %v338 = vsub.f32 %v158, %v337
  %v339 = vand.u32 %v338, 4294901760
  %v340 = vsub.f32 %v338, %v339
  %v341 = vand.u32 %v340, 4294901760
  %342 = vmatmul.mubr.f32.gmra.mrb[0].mxu0 %v341
  %v343 = vpop.f32.mrb[0].mxu0
  %v344 = vadd.f32 0.0, %v343
  %v345 = vpop.f32.mrb[0].mxu0
  %346 = vmatprep.mubr.f32.mxu0 0.0
  %v347 = vand.u32 %v161, 4294901760
  %v348 = vsub.f32 %v161, %v347
  %v349 = vand.u32 %v348, 4294901760
  %v350 = vsub.f32 %v348, %v349
  %v351 = vand.u32 %v350, 4294901760
  %352 = vmatmul.mubr.f32.gmra.mrb[0].mxu0 %v351
  %v353 = vpop.f32.mrb[0].mxu0
  %v354 = vadd.f32 0.0, %v353
  %v355 = vpop.f32.mrb[0].mxu0
  %356 = vmatprep.mubr.f32.mxu0 0.0
  %v357 = vand.u32 %v164, 4294901760
  %v358 = vsub.f32 %v164, %v357
  %v359 = vand.u32 %v358, 4294901760
  %v360 = vsub.f32 %v358, %v359
  %v361 = vand.u32 %v360, 4294901760
  %362 = vmatmul.mubr.f32.gmra.mrb[0].mxu0 %v361
  %v363 = vpop.f32.mrb[0].mxu0
  %v364 = vadd.f32 0.0, %v363
  %v365 = vpop.f32.mrb[0].mxu0
  %366 = vmatprep.mubr.f32.mxu0 0.0
  %v367 = vand.u32 %v167, 4294901760
  %v368 = vsub.f32 %v167, %v367
  %v369 = vand.u32 %v368, 4294901760
  %v370 = vsub.f32 %v368, %v369
  %v371 = vand.u32 %v370, 4294901760
  %372 = vmatmul.mubr.f32.gmra.mrb[0].mxu0 %v371
  %v373 = vpop.f32.mrb[0].mxu0
  %v374 = vadd.f32 0.0, %v373
  %v375 = vpop.f32.mrb[0].mxu0
  %376 = vmatprep.mubr.f32.mxu0 0.0
  %v377 = vand.u32 %v170, 4294901760
  %v378 = vsub.f32 %v170, %v377
  %v379 = vand.u32 %v378, 4294901760
  %v380 = vsub.f32 %v378, %v379
  %v381 = vand.u32 %v380, 4294901760
  %382 = vmatmul.mubr.f32.gmra.mrb[0].mxu0 %v381
  %v383 = vpop.f32.mrb[0].mxu0
  %v384 = vadd.f32 0.0, %v383
  %v385 = vpop.f32.mrb[0].mxu0
  %386 = vmatprep.mubr.f32.mxu0 0.0
  %v387 = vand.u32 %v173, 4294901760
  %v388 = vsub.f32 %v173, %v387
  %v389 = vand.u32 %v388, 4294901760
  %v390 = vsub.f32 %v388, %v389
  %v391 = vand.u32 %v390, 4294901760
  %392 = vmatmul.mubr.f32.gmra.mrb[0].mxu0 %v391
  %v393 = vpop.f32.mrb[0].mxu0
  %v394 = vadd.f32 0.0, %v393
  %v395 = vpop.f32.mrb[0].mxu0
  %396 = vmatprep.mubr.f32.mxu0 0.0
  %v397 = vand.u32 %v176, 4294901760
  %v398 = vsub.f32 %v176, %v397
  %v399 = vand.u32 %v398, 4294901760
  %v400 = vsub.f32 %v398, %v399
  %v401 = vand.u32 %v400, 4294901760
  %402 = vmatmul.mubr.f32.gmra.mrb[0].mxu0 %v401
  %v403 = vpop.f32.mrb[0].mxu0
  %v404 = vadd.f32 0.0, %v403
  %v405 = vpop.f32.mrb[0].mxu0
  %406 = vmatprep.mubr.f32.mxu0 0.0
  %v407 = vand.u32 %v179, 4294901760
  %v408 = vsub.f32 %v179, %v407
  %v409 = vand.u32 %v408, 4294901760
  %v410 = vsub.f32 %v408, %v409
  %v411 = vand.u32 %v410, 4294901760
  %412 = vmatmul.mubr.f32.gmra.mrb[0].mxu0 %v411
  %v413 = vpop.f32.mrb[0].mxu0
  %v414 = vadd.f32 0.0, %v413
  %v415 = vpop.f32.mrb[0].mxu0
  %416 = vdwg.mxu0
  %417 = vmatprep.subr.mxu0 0.0
  %v418 = vand.u32 %v125, 4294901760
  %v419 = vsub.f32 %v125, %v418
  %v420 = vand.u32 %v419, 4294901760
  %v421 = vsub.f32 %v419, %v420
  %v422 = vand.u32 %v421, 4294901760
  %423 = vmatpush1.msra.mxu0 %v422
  %424 = vmatprep.subr.mxu0 0.0
  %v425 = vand.u32 %v126, 4294901760
  %v426 = vsub.f32 %v126, %v425
  %v427 = vand.u32 %v426, 4294901760
  %v428 = vsub.f32 %v426, %v427
  %v429 = vand.u32 %v428, 4294901760
  %430 = vmatpush1.msra.mxu0 %v429
  %431 = vmatprep.subr.mxu0 0.0
  %v432 = vand.u32 %v127, 4294901760
  %v433 = vsub.f32 %v127, %v432
  %v434 = vand.u32 %v433, 4294901760
  %v435 = vsub.f32 %v433, %v434
  %v436 = vand.u32 %v435, 4294901760
  %437 = vmatpush1.msra.mxu0 %v436
  %438 = vmatprep.subr.mxu0 0.0
  %v439 = vand.u32 %v128, 4294901760
  %v440 = vsub.f32 %v128, %v439
  %v441 = vand.u32 %v440, 4294901760
  %v442 = vsub.f32 %v440, %v441
  %v443 = vand.u32 %v442, 4294901760
  %444 = vmatpush1.msra.mxu0 %v443
  %445 = vmatprep.subr.mxu0 0.0
  %v446 = vand.u32 %v129, 4294901760
  %v447 = vsub.f32 %v129, %v446
  %v448 = vand.u32 %v447, 4294901760
  %v449 = vsub.f32 %v447, %v448
  %v450 = vand.u32 %v449, 4294901760
  %451 = vmatpush1.msra.mxu0 %v450
  %452 = vmatprep.subr.mxu0 0.0
  %v453 = vand.u32 %v130, 4294901760
  %v454 = vsub.f32 %v130, %v453
  %v455 = vand.u32 %v454, 4294901760
  %v456 = vsub.f32 %v454, %v455
  %v457 = vand.u32 %v456, 4294901760
  %458 = vmatpush1.msra.mxu0 %v457
  %459 = vmatprep.subr.mxu0 0.0
  %v460 = vand.u32 %v183, 4294901760
  %v461 = vsub.f32 %v183, %v460
  %v462 = vand.u32 %v461, 4294901760
  %v463 = vsub.f32 %v461, %v462
  %v464 = vand.u32 %v463, 4294901760
  %465 = vmatpush1.msra.mxu0 %v464
  %466 = vmatprep.subr.mxu0 0.0
  %467 = vmatpush1.msra.mxu0 0.0
  %468 = vmatprep.subr.mxu0 0.0
  %469 = vmatpush1.msra.mxu0 0.0
  %470 = vmatprep.subr.mxu0 0.0
  %471 = vmatpush1.msra.mxu0 0.0
  %472 = vmatprep.subr.mxu0 0.0
  %473 = vmatpush1.msra.mxu0 0.0
  %474 = vmatprep.subr.mxu0 0.0
  %475 = vmatpush1.msra.mxu0 0.0
  %476 = vmatprep.subr.mxu0 0.0
  %477 = vmatpush1.msra.mxu0 0.0
  %478 = vmatprep.subr.mxu0 0.0
  %479 = vmatpush1.msra.mxu0 0.0
  %480 = vmatprep.subr.mxu0 0.0
  %481 = vmatpush1.msra.mxu0 0.0
  %482 = vmatprep.subr.mxu0 0.0
  %483 = vmatpush1.msra.mxu0 0.0
  %484 = vmatprep.subr.mxu0 0.0
  %485 = vmatpush1.msra.mxu0 0.0
  %486 = vmatprep.subr.mxu0 0.0
  %487 = vmatpush1.msra.mxu0 0.0
  %488 = vmatprep.subr.mxu0 0.0
  %489 = vmatpush1.msra.mxu0 0.0
  %490 = vmatprep.subr.mxu0 0.0
  %491 = vmatpush1.msra.mxu0 0.0
  %492 = vmatprep.subr.mxu0 0.0
  %493 = vmatpush1.msra.mxu0 0.0
  %494 = vmatprep.subr.mxu0 0.0
  %495 = vmatpush1.msra.mxu0 0.0
  %496 = vmatprep.subr.mxu0 0.0
  %497 = vmatpush1.msra.mxu0 0.0
  %498 = vmatprep.subr.mxu0 0.0
  %499 = vmatpush1.msra.mxu0 0.0
  %500 = vmatprep.subr.mxu0 0.0
  %501 = vmatpush1.msra.mxu0 0.0
  %502 = vmatprep.subr.mxu0 0.0
  %503 = vmatpush1.msra.mxu0 0.0
  %504 = vmatprep.subr.mxu0 0.0
  %505 = vmatpush1.msra.mxu0 0.0
  %506 = vmatprep.subr.mxu0 0.0
  %507 = vmatpush1.msra.mxu0 0.0
  %508 = vmatprep.subr.mxu0 0.0
  %509 = vmatpush1.msra.mxu0 0.0
  %510 = vmatprep.subr.mxu0 0.0
  %511 = vmatpush1.msra.mxu0 0.0
  %512 = vmatprep.subr.mxu0 0.0
  %513 = vmatpush1.msra.mxu0 0.0
  %514 = vmatprep.subr.mxu0 0.0
  %515 = vmatpush1.msra.mxu0 0.0
  %516 = vmatprep.mubr.f32.mxu0 0.0
  %v517 = vand.u32 %v134, 4294901760
  %518 = vmatmul.mubr.f32.gmra.mrb[0].mxu0 %v517
  %v519 = vpop.f32.mrb[0].mxu0
  %v520 = vadd.f32 %v264, %v519
  %v521 = vpop.f32.mrb[0].mxu0
  %522 = vmatprep.mubr.f32.mxu0 0.0
  %v523 = vand.u32 %v137, 4294901760
  %524 = vmatmul.mubr.f32.gmra.mrb[0].mxu0 %v523
  %v525 = vpop.f32.mrb[0].mxu0
  %v526 = vadd.f32 %v274, %v525
  %v527 = vpop.f32.mrb[0].mxu0
  %528 = vmatprep.mubr.f32.mxu0 0.0
  %v529 = vand.u32 %v140, 4294901760
  %530 = vmatmul.mubr.f32.gmra.mrb[0].mxu0 %v529
  %v531 = vpop.f32.mrb[0].mxu0
  %v532 = vadd.f32 %v284, %v531
  %v533 = vpop.f32.mrb[0].mxu0
  %534 = vmatprep.mubr.f32.mxu0 0.0
  %v535 = vand.u32 %v143, 4294901760
  %536 = vmatmul.mubr.f32.gmra.mrb[0].mxu0 %v535
  %v537 = vpop.f32.mrb[0].mxu0
  %v538 = vadd.f32 %v294, %v537
  %v539 = vpop.f32.mrb[0].mxu0
  %540 = vmatprep.mubr.f32.mxu0 0.0
  %v541 = vand.u32 %v146, 4294901760
  %542 = vmatmul.mubr.f32.gmra.mrb[0].mxu0 %v541
  %v543 = vpop.f32.mrb[0].mxu0
  %v544 = vadd.f32 %v304, %v543
  %v545 = vpop.f32.mrb[0].mxu0
  %546 = vmatprep.mubr.f32.mxu0 0.0
  %v547 = vand.u32 %v149, 4294901760
  %548 = vmatmul.mubr.f32.gmra.mrb[0].mxu0 %v547
  %v549 = vpop.f32.mrb[0].mxu0
  %v550 = vadd.f32 %v314, %v549
  %v551 = vpop.f32.mrb[0].mxu0
  %552 = vmatprep.mubr.f32.mxu0 0.0
  %v553 = vand.u32 %v152, 4294901760
  %554 = vmatmul.mubr.f32.gmra.mrb[0].mxu0 %v553
  %v555 = vpop.f32.mrb[0].mxu0
  %v556 = vadd.f32 %v324, %v555
  %v557 = vpop.f32.mrb[0].mxu0
  %558 = vmatprep.mubr.f32.mxu0 0.0
  %v559 = vand.u32 %v155, 4294901760
  %560 = vmatmul.mubr.f32.gmra.mrb[0].mxu0 %v559
  %v561 = vpop.f32.mrb[0].mxu0
  %v562 = vadd.f32 %v334, %v561
  %v563 = vpop.f32.mrb[0].mxu0
  %564 = vmatprep.mubr.f32.mxu0 0.0
  %v565 = vand.u32 %v158, 4294901760
  %566 = vmatmul.mubr.f32.gmra.mrb[0].mxu0 %v565
  %v567 = vpop.f32.mrb[0].mxu0
  %v568 = vadd.f32 %v344, %v567
  %v569 = vpop.f32.mrb[0].mxu0
  %570 = vmatprep.mubr.f32.mxu0 0.0
  %v571 = vand.u32 %v161, 4294901760
  %572 = vmatmul.mubr.f32.gmra.mrb[0].mxu0 %v571
  %v573 = vpop.f32.mrb[0].mxu0
  %v574 = vadd.f32 %v354, %v573
  %v575 = vpop.f32.mrb[0].mxu0
  %576 = vmatprep.mubr.f32.mxu0 0.0
  %v577 = vand.u32 %v164, 4294901760
  %578 = vmatmul.mubr.f32.gmra.mrb[0].mxu0 %v577
  %v579 = vpop.f32.mrb[0].mxu0
  %v580 = vadd.f32 %v364, %v579
  %v581 = vpop.f32.mrb[0].mxu0
  %582 = vmatprep.mubr.f32.mxu0 0.0
  %v583 = vand.u32 %v167, 4294901760
  %584 = vmatmul.mubr.f32.gmra.mrb[0].mxu0 %v583
  %v585 = vpop.f32.mrb[0].mxu0
  %v586 = vadd.f32 %v374, %v585
  %v587 = vpop.f32.mrb[0].mxu0
  %588 = vmatprep.mubr.f32.mxu0 0.0
  %v589 = vand.u32 %v170, 4294901760
  %590 = vmatmul.mubr.f32.gmra.mrb[0].mxu0 %v589
  %v591 = vpop.f32.mrb[0].mxu0
  %v592 = vadd.f32 %v384, %v591
  %v593 = vpop.f32.mrb[0].mxu0
  %594 = vmatprep.mubr.f32.mxu0 0.0
  %v595 = vand.u32 %v173, 4294901760
  %596 = vmatmul.mubr.f32.gmra.mrb[0].mxu0 %v595
  %v597 = vpop.f32.mrb[0].mxu0
  %v598 = vadd.f32 %v394, %v597
  %v599 = vpop.f32.mrb[0].mxu0
  %600 = vmatprep.mubr.f32.mxu0 0.0
  %v601 = vand.u32 %v176, 4294901760
  %602 = vmatmul.mubr.f32.gmra.mrb[0].mxu0 %v601
  %v603 = vpop.f32.mrb[0].mxu0
  %v604 = vadd.f32 %v404, %v603
  %v605 = vpop.f32.mrb[0].mxu0
  %606 = vmatprep.mubr.f32.mxu0 0.0
  %v607 = vand.u32 %v179, 4294901760
  %608 = vmatmul.mubr.f32.gmra.mrb[0].mxu0 %v607
  %v609 = vpop.f32.mrb[0].mxu0
  %v610 = vadd.f32 %v414, %v609
  %v611 = vpop.f32.mrb[0].mxu0
  %612 = vdwg.mxu0
  %613 = vmatprep.subr.mxu0 0.0
  %v614 = vand.u32 %v125, 4294901760
  %v615 = vsub.f32 %v125, %v614
  %616 = vmatpush1.msra.mxu0 %v615
  %617 = vmatprep.subr.mxu0 0.0
  %v618 = vand.u32 %v126, 4294901760
  %v619 = vsub.f32 %v126, %v618
  %620 = vmatpush1.msra.mxu0 %v619
  %621 = vmatprep.subr.mxu0 0.0
  %v622 = vand.u32 %v127, 4294901760
  %v623 = vsub.f32 %v127, %v622
  %624 = vmatpush1.msra.mxu0 %v623
  %625 = vmatprep.subr.mxu0 0.0
  %v626 = vand.u32 %v128, 4294901760
  %v627 = vsub.f32 %v128, %v626
  %628 = vmatpush1.msra.mxu0 %v627
  %629 = vmatprep.subr.mxu0 0.0
  %v630 = vand.u32 %v129, 4294901760
  %v631 = vsub.f32 %v129, %v630
  %632 = vmatpush1.msra.mxu0 %v631
  %633 = vmatprep.subr.mxu0 0.0
  %v634 = vand.u32 %v130, 4294901760
  %v635 = vsub.f32 %v130, %v634
  %636 = vmatpush1.msra.mxu0 %v635
  %637 = vmatprep.subr.mxu0 0.0
  %v638 = vand.u32 %v183, 4294901760
  %v639 = vsub.f32 %v183, %v638
  %640 = vmatpush1.msra.mxu0 %v639
  %641 = vmatprep.subr.mxu0 0.0
  %642 = vmatpush1.msra.mxu0 0.0
  %643 = vmatprep.subr.mxu0 0.0
  %644 = vmatpush1.msra.mxu0 0.0
  %645 = vmatprep.subr.mxu0 0.0
  %646 = vmatpush1.msra.mxu0 0.0
  %647 = vmatprep.subr.mxu0 0.0
  %648 = vmatpush1.msra.mxu0 0.0
  %649 = vmatprep.subr.mxu0 0.0
  %650 = vmatpush1.msra.mxu0 0.0
  %651 = vmatprep.subr.mxu0 0.0
  %652 = vmatpush1.msra.mxu0 0.0
  %653 = vmatprep.subr.mxu0 0.0
  %654 = vmatpush1.msra.mxu0 0.0
  %655 = vmatprep.subr.mxu0 0.0
  %656 = vmatpush1.msra.mxu0 0.0
  %657 = vmatprep.subr.mxu0 0.0
  %658 = vmatpush1.msra.mxu0 0.0
  %659 = vmatprep.subr.mxu0 0.0
  %660 = vmatpush1.msra.mxu0 0.0
  %661 = vmatprep.subr.mxu0 0.0
  %662 = vmatpush1.msra.mxu0 0.0
  %663 = vmatprep.subr.mxu0 0.0
  %664 = vmatpush1.msra.mxu0 0.0
  %665 = vmatprep.subr.mxu0 0.0
  %666 = vmatpush1.msra.mxu0 0.0
  %667 = vmatprep.subr.mxu0 0.0
  %668 = vmatpush1.msra.mxu0 0.0
  %669 = vmatprep.subr.mxu0 0.0
  %670 = vmatpush1.msra.mxu0 0.0
  %671 = vmatprep.subr.mxu0 0.0
  %672 = vmatpush1.msra.mxu0 0.0
  %673 = vmatprep.subr.mxu0 0.0
  %674 = vmatpush1.msra.mxu0 0.0
  %675 = vmatprep.subr.mxu0 0.0
  %676 = vmatpush1.msra.mxu0 0.0
  %677 = vmatprep.subr.mxu0 0.0
  %678 = vmatpush1.msra.mxu0 0.0
  %679 = vmatprep.subr.mxu0 0.0
  %680 = vmatpush1.msra.mxu0 0.0
  %681 = vmatprep.subr.mxu0 0.0
  %682 = vmatpush1.msra.mxu0 0.0
  %683 = vmatprep.subr.mxu0 0.0
  %684 = vmatpush1.msra.mxu0 0.0
  %685 = vmatprep.subr.mxu0 0.0
  %686 = vmatpush1.msra.mxu0 0.0
  %687 = vmatprep.subr.mxu0 0.0
  %688 = vmatpush1.msra.mxu0 0.0
  %689 = vmatprep.subr.mxu0 0.0
  %690 = vmatpush1.msra.mxu0 0.0
  %691 = vmatprep.mubr.f32.mxu0 0.0
  %v692 = vand.u32 %v134, 4294901760
  %v693 = vsub.f32 %v134, %v692
  %694 = vmatmul.mubr.f32.gmra.mrb[0].mxu0 %v693
  %v695 = vpop.f32.mrb[0].mxu0
  %v696 = vadd.f32 %v520, %v695
  %v697 = vpop.f32.mrb[0].mxu0
  %698 = vmatprep.mubr.f32.mxu0 0.0
  %v699 = vand.u32 %v137, 4294901760
  %v700 = vsub.f32 %v137, %v699
  %701 = vmatmul.mubr.f32.gmra.mrb[0].mxu0 %v700
  %v702 = vpop.f32.mrb[0].mxu0
  %v703 = vadd.f32 %v526, %v702
  %v704 = vpop.f32.mrb[0].mxu0
  %705 = vmatprep.mubr.f32.mxu0 0.0
  %v706 = vand.u32 %v140, 4294901760
  %v707 = vsub.f32 %v140, %v706
  %708 = vmatmul.mubr.f32.gmra.mrb[0].mxu0 %v707
  %v709 = vpop.f32.mrb[0].mxu0
  %v710 = vadd.f32 %v532, %v709
  %v711 = vpop.f32.mrb[0].mxu0
  %712 = vmatprep.mubr.f32.mxu0 0.0
  %v713 = vand.u32 %v143, 4294901760
  %v714 = vsub.f32 %v143, %v713
  %715 = vmatmul.mubr.f32.gmra.mrb[0].mxu0 %v714
  %v716 = vpop.f32.mrb[0].mxu0
  %v717 = vadd.f32 %v538, %v716
  %v718 = vpop.f32.mrb[0].mxu0
  %719 = vmatprep.mubr.f32.mxu0 0.0
  %v720 = vand.u32 %v146, 4294901760
  %v721 = vsub.f32 %v146, %v720
  %722 = vmatmul.mubr.f32.gmra.mrb[0].mxu0 %v721
  %v723 = vpop.f32.mrb[0].mxu0
  %v724 = vadd.f32 %v544, %v723
  %v725 = vpop.f32.mrb[0].mxu0
  %726 = vmatprep.mubr.f32.mxu0 0.0
  %v727 = vand.u32 %v149, 4294901760
  %v728 = vsub.f32 %v149, %v727
  %729 = vmatmul.mubr.f32.gmra.mrb[0].mxu0 %v728
  %v730 = vpop.f32.mrb[0].mxu0
  %v731 = vadd.f32 %v550, %v730
  %v732 = vpop.f32.mrb[0].mxu0
  %733 = vmatprep.mubr.f32.mxu0 0.0
  %v734 = vand.u32 %v152, 4294901760
  %v735 = vsub.f32 %v152, %v734
  %736 = vmatmul.mubr.f32.gmra.mrb[0].mxu0 %v735
  %v737 = vpop.f32.mrb[0].mxu0
  %v738 = vadd.f32 %v556, %v737
  %v739 = vpop.f32.mrb[0].mxu0
  %740 = vmatprep.mubr.f32.mxu0 0.0
  %v741 = vand.u32 %v155, 4294901760
  %v742 = vsub.f32 %v155, %v741
  %743 = vmatmul.mubr.f32.gmra.mrb[0].mxu0 %v742
  %v744 = vpop.f32.mrb[0].mxu0
  %v745 = vadd.f32 %v562, %v744
  %v746 = vpop.f32.mrb[0].mxu0
  %747 = vmatprep.mubr.f32.mxu0 0.0
  %v748 = vand.u32 %v158, 4294901760
  %v749 = vsub.f32 %v158, %v748
  %750 = vmatmul.mubr.f32.gmra.mrb[0].mxu0 %v749
  %v751 = vpop.f32.mrb[0].mxu0
  %v752 = vadd.f32 %v568, %v751
  %v753 = vpop.f32.mrb[0].mxu0
  %754 = vmatprep.mubr.f32.mxu0 0.0
  %v755 = vand.u32 %v161, 4294901760
  %v756 = vsub.f32 %v161, %v755
  %757 = vmatmul.mubr.f32.gmra.mrb[0].mxu0 %v756
  %v758 = vpop.f32.mrb[0].mxu0
  %v759 = vadd.f32 %v574, %v758
  %v760 = vpop.f32.mrb[0].mxu0
  %761 = vmatprep.mubr.f32.mxu0 0.0
  %v762 = vand.u32 %v164, 4294901760
  %v763 = vsub.f32 %v164, %v762
  %764 = vmatmul.mubr.f32.gmra.mrb[0].mxu0 %v763
  %v765 = vpop.f32.mrb[0].mxu0
  %v766 = vadd.f32 %v580, %v765
  %v767 = vpop.f32.mrb[0].mxu0
  %768 = vmatprep.mubr.f32.mxu0 0.0
  %v769 = vand.u32 %v167, 4294901760
  %v770 = vsub.f32 %v167, %v769
  %771 = vmatmul.mubr.f32.gmra.mrb[0].mxu0 %v770
  %v772 = vpop.f32.mrb[0].mxu0
  %v773 = vadd.f32 %v586, %v772
  %v774 = vpop.f32.mrb[0].mxu0
  %775 = vmatprep.mubr.f32.mxu0 0.0
  %v776 = vand.u32 %v170, 4294901760
  %v777 = vsub.f32 %v170, %v776
  %778 = vmatmul.mubr.f32.gmra.mrb[0].mxu0 %v777
  %v779 = vpop.f32.mrb[0].mxu0
  %v780 = vadd.f32 %v592, %v779
  %v781 = vpop.f32.mrb[0].mxu0
  %782 = vmatprep.mubr.f32.mxu0 0.0
  %v783 = vand.u32 %v173, 4294901760
  %v784 = vsub.f32 %v173, %v783
  %785 = vmatmul.mubr.f32.gmra.mrb[0].mxu0 %v784
  %v786 = vpop.f32.mrb[0].mxu0
  %v787 = vadd.f32 %v598, %v786
  %v788 = vpop.f32.mrb[0].mxu0
  %789 = vmatprep.mubr.f32.mxu0 0.0
  %v790 = vand.u32 %v176, 4294901760
  %v791 = vsub.f32 %v176, %v790
  %792 = vmatmul.mubr.f32.gmra.mrb[0].mxu0 %v791
  %v793 = vpop.f32.mrb[0].mxu0
  %v794 = vadd.f32 %v604, %v793
  %v795 = vpop.f32.mrb[0].mxu0
  %796 = vmatprep.mubr.f32.mxu0 0.0
  %v797 = vand.u32 %v179, 4294901760
  %v798 = vsub.f32 %v179, %v797
  %799 = vmatmul.mubr.f32.gmra.mrb[0].mxu0 %v798
  %v800 = vpop.f32.mrb[0].mxu0
  %v801 = vadd.f32 %v610, %v800
  %v802 = vpop.f32.mrb[0].mxu0
  %803 = vdwg.mxu0
  %804 = vmatprep.subr.mxu0 0.0
  %v805 = vand.u32 %v125, 4294901760
  %806 = vmatpush1.msra.mxu0 %v805
  %807 = vmatprep.subr.mxu0 0.0
  %v808 = vand.u32 %v126, 4294901760
  %809 = vmatpush1.msra.mxu0 %v808
  %810 = vmatprep.subr.mxu0 0.0
  %v811 = vand.u32 %v127, 4294901760
  %812 = vmatpush1.msra.mxu0 %v811
  %813 = vmatprep.subr.mxu0 0.0
  %v814 = vand.u32 %v128, 4294901760
  %815 = vmatpush1.msra.mxu0 %v814
  %816 = vmatprep.subr.mxu0 0.0
  %v817 = vand.u32 %v129, 4294901760
  %818 = vmatpush1.msra.mxu0 %v817
  %819 = vmatprep.subr.mxu0 0.0
  %v820 = vand.u32 %v130, 4294901760
  %821 = vmatpush1.msra.mxu0 %v820
  %822 = vmatprep.subr.mxu0 0.0
  %v823 = vand.u32 %v183, 4294901760
  %824 = vmatpush1.msra.mxu0 %v823
  %825 = vmatprep.subr.mxu0 0.0
  %826 = vmatpush1.msra.mxu0 0.0
  %827 = vmatprep.subr.mxu0 0.0
  %828 = vmatpush1.msra.mxu0 0.0
  %829 = vmatprep.subr.mxu0 0.0
  %830 = vmatpush1.msra.mxu0 0.0
  %831 = vmatprep.subr.mxu0 0.0
  %832 = vmatpush1.msra.mxu0 0.0
  %833 = vmatprep.subr.mxu0 0.0
  %834 = vmatpush1.msra.mxu0 0.0
  %835 = vmatprep.subr.mxu0 0.0
  %836 = vmatpush1.msra.mxu0 0.0
  %837 = vmatprep.subr.mxu0 0.0
  %838 = vmatpush1.msra.mxu0 0.0
  %839 = vmatprep.subr.mxu0 0.0
  %840 = vmatpush1.msra.mxu0 0.0
  %841 = vmatprep.subr.mxu0 0.0
  %842 = vmatpush1.msra.mxu0 0.0
  %843 = vmatprep.subr.mxu0 0.0
  %844 = vmatpush1.msra.mxu0 0.0
  %845 = vmatprep.subr.mxu0 0.0
  %846 = vmatpush1.msra.mxu0 0.0
  %847 = vmatprep.subr.mxu0 0.0
  %848 = vmatpush1.msra.mxu0 0.0
  %849 = vmatprep.subr.mxu0 0.0
  %850 = vmatpush1.msra.mxu0 0.0
  %851 = vmatprep.subr.mxu0 0.0
  %852 = vmatpush1.msra.mxu0 0.0
  %853 = vmatprep.subr.mxu0 0.0
  %854 = vmatpush1.msra.mxu0 0.0
  %855 = vmatprep.subr.mxu0 0.0
  %856 = vmatpush1.msra.mxu0 0.0
  %857 = vmatprep.subr.mxu0 0.0
  %858 = vmatpush1.msra.mxu0 0.0
  %859 = vmatprep.subr.mxu0 0.0
  %860 = vmatpush1.msra.mxu0 0.0
  %861 = vmatprep.subr.mxu0 0.0
  %862 = vmatpush1.msra.mxu0 0.0
  %863 = vmatprep.subr.mxu0 0.0
  %864 = vmatpush1.msra.mxu0 0.0
  %865 = vmatprep.subr.mxu0 0.0
  %866 = vmatpush1.msra.mxu0 0.0
  %867 = vmatprep.subr.mxu0 0.0
  %868 = vmatpush1.msra.mxu0 0.0
  %869 = vmatprep.subr.mxu0 0.0
  %870 = vmatpush1.msra.mxu0 0.0
  %871 = vmatprep.subr.mxu0 0.0
  %872 = vmatpush1.msra.mxu0 0.0
  %873 = vmatprep.subr.mxu0 0.0
  %874 = vmatpush1.msra.mxu0 0.0
  %875 = vmatprep.mubr.f32.mxu0 0.0
  %v876 = vand.u32 %v134, 4294901760
  %v877 = vsub.f32 %v134, %v876
  %v878 = vand.u32 %v877, 4294901760
  %879 = vmatmul.mubr.f32.gmra.mrb[0].mxu0 %v878
  %v880 = vpop.f32.mrb[0].mxu0
  %v881 = vadd.f32 %v696, %v880
  %v882 = vpop.f32.mrb[0].mxu0
  %883 = vmatprep.mubr.f32.mxu0 0.0
  %v884 = vand.u32 %v137, 4294901760
  %v885 = vsub.f32 %v137, %v884
  %v886 = vand.u32 %v885, 4294901760
  %887 = vmatmul.mubr.f32.gmra.mrb[0].mxu0 %v886
  %v888 = vpop.f32.mrb[0].mxu0
  %v889 = vadd.f32 %v703, %v888
  %v890 = vpop.f32.mrb[0].mxu0
  %891 = vmatprep.mubr.f32.mxu0 0.0
  %v892 = vand.u32 %v140, 4294901760
  %v893 = vsub.f32 %v140, %v892
  %v894 = vand.u32 %v893, 4294901760
  %895 = vmatmul.mubr.f32.gmra.mrb[0].mxu0 %v894
  %v896 = vpop.f32.mrb[0].mxu0
  %v897 = vadd.f32 %v710, %v896
  %v898 = vpop.f32.mrb[0].mxu0
  %899 = vmatprep.mubr.f32.mxu0 0.0
  %v900 = vand.u32 %v143, 4294901760
  %v901 = vsub.f32 %v143, %v900
  %v902 = vand.u32 %v901, 4294901760
  %903 = vmatmul.mubr.f32.gmra.mrb[0].mxu0 %v902
  %v904 = vpop.f32.mrb[0].mxu0
  %v905 = vadd.f32 %v717, %v904
  %v906 = vpop.f32.mrb[0].mxu0
  %907 = vmatprep.mubr.f32.mxu0 0.0
  %v908 = vand.u32 %v146, 4294901760
  %v909 = vsub.f32 %v146, %v908
  %v910 = vand.u32 %v909, 4294901760
  %911 = vmatmul.mubr.f32.gmra.mrb[0].mxu0 %v910
  %v912 = vpop.f32.mrb[0].mxu0
  %v913 = vadd.f32 %v724, %v912
  %v914 = vpop.f32.mrb[0].mxu0
  %915 = vmatprep.mubr.f32.mxu0 0.0
  %v916 = vand.u32 %v149, 4294901760
  %v917 = vsub.f32 %v149, %v916
  %v918 = vand.u32 %v917, 4294901760
  %919 = vmatmul.mubr.f32.gmra.mrb[0].mxu0 %v918
  %v920 = vpop.f32.mrb[0].mxu0
  %v921 = vadd.f32 %v731, %v920
  %v922 = vpop.f32.mrb[0].mxu0
  %923 = vmatprep.mubr.f32.mxu0 0.0
  %v924 = vand.u32 %v152, 4294901760
  %v925 = vsub.f32 %v152, %v924
  %v926 = vand.u32 %v925, 4294901760
  %927 = vmatmul.mubr.f32.gmra.mrb[0].mxu0 %v926
  %v928 = vpop.f32.mrb[0].mxu0
  %v929 = vadd.f32 %v738, %v928
  %v930 = vpop.f32.mrb[0].mxu0
  %931 = vmatprep.mubr.f32.mxu0 0.0
  %v932 = vand.u32 %v155, 4294901760
  %v933 = vsub.f32 %v155, %v932
  %v934 = vand.u32 %v933, 4294901760
  %935 = vmatmul.mubr.f32.gmra.mrb[0].mxu0 %v934
  %v936 = vpop.f32.mrb[0].mxu0
  %v937 = vadd.f32 %v745, %v936
  %v938 = vpop.f32.mrb[0].mxu0
  %939 = vmatprep.mubr.f32.mxu0 0.0
  %v940 = vand.u32 %v158, 4294901760
  %v941 = vsub.f32 %v158, %v940
  %v942 = vand.u32 %v941, 4294901760
  %943 = vmatmul.mubr.f32.gmra.mrb[0].mxu0 %v942
  %v944 = vpop.f32.mrb[0].mxu0
  %v945 = vadd.f32 %v752, %v944
  %v946 = vpop.f32.mrb[0].mxu0
  %947 = vmatprep.mubr.f32.mxu0 0.0
  %v948 = vand.u32 %v161, 4294901760
  %v949 = vsub.f32 %v161, %v948
  %v950 = vand.u32 %v949, 4294901760
  %951 = vmatmul.mubr.f32.gmra.mrb[0].mxu0 %v950
  %v952 = vpop.f32.mrb[0].mxu0
  %v953 = vadd.f32 %v759, %v952
  %v954 = vpop.f32.mrb[0].mxu0
  %955 = vmatprep.mubr.f32.mxu0 0.0
  %v956 = vand.u32 %v164, 4294901760
  %v957 = vsub.f32 %v164, %v956
  %v958 = vand.u32 %v957, 4294901760
  %959 = vmatmul.mubr.f32.gmra.mrb[0].mxu0 %v958
  %v960 = vpop.f32.mrb[0].mxu0
  %v961 = vadd.f32 %v766, %v960
  %v962 = vpop.f32.mrb[0].mxu0
  %963 = vmatprep.mubr.f32.mxu0 0.0
  %v964 = vand.u32 %v167, 4294901760
  %v965 = vsub.f32 %v167, %v964
  %v966 = vand.u32 %v965, 4294901760
  %967 = vmatmul.mubr.f32.gmra.mrb[0].mxu0 %v966
  %v968 = vpop.f32.mrb[0].mxu0
  %v969 = vadd.f32 %v773, %v968
  %v970 = vpop.f32.mrb[0].mxu0
  %971 = vmatprep.mubr.f32.mxu0 0.0
  %v972 = vand.u32 %v170, 4294901760
  %v973 = vsub.f32 %v170, %v972
  %v974 = vand.u32 %v973, 4294901760
  %975 = vmatmul.mubr.f32.gmra.mrb[0].mxu0 %v974
  %v976 = vpop.f32.mrb[0].mxu0
  %v977 = vadd.f32 %v780, %v976
  %v978 = vpop.f32.mrb[0].mxu0
  %979 = vmatprep.mubr.f32.mxu0 0.0
  %v980 = vand.u32 %v173, 4294901760
  %v981 = vsub.f32 %v173, %v980
  %v982 = vand.u32 %v981, 4294901760
  %983 = vmatmul.mubr.f32.gmra.mrb[0].mxu0 %v982
  %v984 = vpop.f32.mrb[0].mxu0
  %v985 = vadd.f32 %v787, %v984
  %v986 = vpop.f32.mrb[0].mxu0
  %987 = vmatprep.mubr.f32.mxu0 0.0
  %v988 = vand.u32 %v176, 4294901760
  %v989 = vsub.f32 %v176, %v988
  %v990 = vand.u32 %v989, 4294901760
  %991 = vmatmul.mubr.f32.gmra.mrb[0].mxu0 %v990
  %v992 = vpop.f32.mrb[0].mxu0
  %v993 = vadd.f32 %v794, %v992
  %v994 = vpop.f32.mrb[0].mxu0
  %995 = vmatprep.mubr.f32.mxu0 0.0
  %v996 = vand.u32 %v179, 4294901760
  %v997 = vsub.f32 %v179, %v996
  %v998 = vand.u32 %v997, 4294901760
  %999 = vmatmul.mubr.f32.gmra.mrb[0].mxu0 %v998
  %v1000 = vpop.f32.mrb[0].mxu0
  %v1001 = vadd.f32 %v801, %v1000
  %v1002 = vpop.f32.mrb[0].mxu0
  %1003 = vdwg.mxu0
  %1004 = vmatprep.subr.mxu0 0.0
  %v1005 = vand.u32 %v125, 4294901760
  %v1006 = vsub.f32 %v125, %v1005
  %v1007 = vand.u32 %v1006, 4294901760
  %1008 = vmatpush1.msra.mxu0 %v1007
  %1009 = vmatprep.subr.mxu0 0.0
  %v1010 = vand.u32 %v126, 4294901760
  %v1011 = vsub.f32 %v126, %v1010
  %v1012 = vand.u32 %v1011, 4294901760
  %1013 = vmatpush1.msra.mxu0 %v1012
  %1014 = vmatprep.subr.mxu0 0.0
  %v1015 = vand.u32 %v127, 4294901760
  %v1016 = vsub.f32 %v127, %v1015
  %v1017 = vand.u32 %v1016, 4294901760
  %1018 = vmatpush1.msra.mxu0 %v1017
  %1019 = vmatprep.subr.mxu0 0.0
  %v1020 = vand.u32 %v128, 4294901760
  %v1021 = vsub.f32 %v128, %v1020
  %v1022 = vand.u32 %v1021, 4294901760
  %1023 = vmatpush1.msra.mxu0 %v1022
  %1024 = vmatprep.subr.mxu0 0.0
  %v1025 = vand.u32 %v129, 4294901760
  %v1026 = vsub.f32 %v129, %v1025
  %v1027 = vand.u32 %v1026, 4294901760
  %1028 = vmatpush1.msra.mxu0 %v1027
  %1029 = vmatprep.subr.mxu0 0.0
  %v1030 = vand.u32 %v130, 4294901760
  %v1031 = vsub.f32 %v130, %v1030
  %v1032 = vand.u32 %v1031, 4294901760
  %1033 = vmatpush1.msra.mxu0 %v1032
  %1034 = vmatprep.subr.mxu0 0.0
  %v1035 = vand.u32 %v183, 4294901760
  %v1036 = vsub.f32 %v183, %v1035
  %v1037 = vand.u32 %v1036, 4294901760
  %1038 = vmatpush1.msra.mxu0 %v1037
  %1039 = vmatprep.subr.mxu0 0.0
  %1040 = vmatpush1.msra.mxu0 0.0
  %1041 = vmatprep.subr.mxu0 0.0
  %1042 = vmatpush1.msra.mxu0 0.0
  %1043 = vmatprep.subr.mxu0 0.0
  %1044 = vmatpush1.msra.mxu0 0.0
  %1045 = vmatprep.subr.mxu0 0.0
  %1046 = vmatpush1.msra.mxu0 0.0
  %1047 = vmatprep.subr.mxu0 0.0
  %1048 = vmatpush1.msra.mxu0 0.0
  %1049 = vmatprep.subr.mxu0 0.0
  %1050 = vmatpush1.msra.mxu0 0.0
  %1051 = vmatprep.subr.mxu0 0.0
  %1052 = vmatpush1.msra.mxu0 0.0
  %1053 = vmatprep.subr.mxu0 0.0
  %1054 = vmatpush1.msra.mxu0 0.0
  %1055 = vmatprep.subr.mxu0 0.0
  %1056 = vmatpush1.msra.mxu0 0.0
  %1057 = vmatprep.subr.mxu0 0.0
  %1058 = vmatpush1.msra.mxu0 0.0
  %1059 = vmatprep.subr.mxu0 0.0
  %1060 = vmatpush1.msra.mxu0 0.0
  %1061 = vmatprep.subr.mxu0 0.0
  %1062 = vmatpush1.msra.mxu0 0.0
  %1063 = vmatprep.subr.mxu0 0.0
  %1064 = vmatpush1.msra.mxu0 0.0
  %1065 = vmatprep.subr.mxu0 0.0
  %1066 = vmatpush1.msra.mxu0 0.0
  %1067 = vmatprep.subr.mxu0 0.0
  %1068 = vmatpush1.msra.mxu0 0.0
  %1069 = vmatprep.subr.mxu0 0.0
  %1070 = vmatpush1.msra.mxu0 0.0
  %1071 = vmatprep.subr.mxu0 0.0
  %1072 = vmatpush1.msra.mxu0 0.0
  %1073 = vmatprep.subr.mxu0 0.0
  %1074 = vmatpush1.msra.mxu0 0.0
  %1075 = vmatprep.subr.mxu0 0.0
  %1076 = vmatpush1.msra.mxu0 0.0
  %1077 = vmatprep.subr.mxu0 0.0
  %1078 = vmatpush1.msra.mxu0 0.0
  %1079 = vmatprep.subr.mxu0 0.0
  %1080 = vmatpush1.msra.mxu0 0.0
  %1081 = vmatprep.subr.mxu0 0.0
  %1082 = vmatpush1.msra.mxu0 0.0
  %1083 = vmatprep.subr.mxu0 0.0
  %1084 = vmatpush1.msra.mxu0 0.0
  %1085 = vmatprep.subr.mxu0 0.0
  %1086 = vmatpush1.msra.mxu0 0.0
  %1087 = vmatprep.subr.mxu0 0.0
  %1088 = vmatpush1.msra.mxu0 0.0
  %1089 = vmatprep.mubr.f32.mxu0 0.0
  %v1090 = vand.u32 %v134, 4294901760
  %1091 = vmatmul.mubr.f32.gmra.mrb[0].mxu0 %v1090
  %v1092 = vpop.f32.mrb[0].mxu0
  %v1093 = vadd.f32 %v881, %v1092
  %v1094 = vpop.f32.mrb[0].mxu0
  %1095 = vmatprep.mubr.f32.mxu0 0.0
  %v1096 = vand.u32 %v137, 4294901760
  %1097 = vmatmul.mubr.f32.gmra.mrb[0].mxu0 %v1096
  %v1098 = vpop.f32.mrb[0].mxu0
  %v1099 = vadd.f32 %v889, %v1098
  %v1100 = vpop.f32.mrb[0].mxu0
  %1101 = vmatprep.mubr.f32.mxu0 0.0
  %v1102 = vand.u32 %v140, 4294901760
  %1103 = vmatmul.mubr.f32.gmra.mrb[0].mxu0 %v1102
  %v1104 = vpop.f32.mrb[0].mxu0
  %v1105 = vadd.f32 %v897, %v1104
  %v1106 = vpop.f32.mrb[0].mxu0
  %1107 = vmatprep.mubr.f32.mxu0 0.0
  %v1108 = vand.u32 %v143, 4294901760
  %1109 = vmatmul.mubr.f32.gmra.mrb[0].mxu0 %v1108
  %v1110 = vpop.f32.mrb[0].mxu0
  %v1111 = vadd.f32 %v905, %v1110
  %v1112 = vpop.f32.mrb[0].mxu0
  %1113 = vmatprep.mubr.f32.mxu0 0.0
  %v1114 = vand.u32 %v146, 4294901760
  %1115 = vmatmul.mubr.f32.gmra.mrb[0].mxu0 %v1114
  %v1116 = vpop.f32.mrb[0].mxu0
  %v1117 = vadd.f32 %v913, %v1116
  %v1118 = vpop.f32.mrb[0].mxu0
  %1119 = vmatprep.mubr.f32.mxu0 0.0
  %v1120 = vand.u32 %v149, 4294901760
  %1121 = vmatmul.mubr.f32.gmra.mrb[0].mxu0 %v1120
  %v1122 = vpop.f32.mrb[0].mxu0
  %v1123 = vadd.f32 %v921, %v1122
  %v1124 = vpop.f32.mrb[0].mxu0
  %1125 = vmatprep.mubr.f32.mxu0 0.0
  %v1126 = vand.u32 %v152, 4294901760
  %1127 = vmatmul.mubr.f32.gmra.mrb[0].mxu0 %v1126
  %v1128 = vpop.f32.mrb[0].mxu0
  %v1129 = vadd.f32 %v929, %v1128
  %v1130 = vpop.f32.mrb[0].mxu0
  %1131 = vmatprep.mubr.f32.mxu0 0.0
  %v1132 = vand.u32 %v155, 4294901760
  %1133 = vmatmul.mubr.f32.gmra.mrb[0].mxu0 %v1132
  %v1134 = vpop.f32.mrb[0].mxu0
  %v1135 = vadd.f32 %v937, %v1134
  %v1136 = vpop.f32.mrb[0].mxu0
  %1137 = vmatprep.mubr.f32.mxu0 0.0
  %v1138 = vand.u32 %v158, 4294901760
  %1139 = vmatmul.mubr.f32.gmra.mrb[0].mxu0 %v1138
  %v1140 = vpop.f32.mrb[0].mxu0
  %v1141 = vadd.f32 %v945, %v1140
  %v1142 = vpop.f32.mrb[0].mxu0
  %1143 = vmatprep.mubr.f32.mxu0 0.0
  %v1144 = vand.u32 %v161, 4294901760
  %1145 = vmatmul.mubr.f32.gmra.mrb[0].mxu0 %v1144
  %v1146 = vpop.f32.mrb[0].mxu0
  %v1147 = vadd.f32 %v953, %v1146
  %v1148 = vpop.f32.mrb[0].mxu0
  %1149 = vmatprep.mubr.f32.mxu0 0.0
  %v1150 = vand.u32 %v164, 4294901760
  %1151 = vmatmul.mubr.f32.gmra.mrb[0].mxu0 %v1150
  %v1152 = vpop.f32.mrb[0].mxu0
  %v1153 = vadd.f32 %v961, %v1152
  %v1154 = vpop.f32.mrb[0].mxu0
  %1155 = vmatprep.mubr.f32.mxu0 0.0
  %v1156 = vand.u32 %v167, 4294901760
  %1157 = vmatmul.mubr.f32.gmra.mrb[0].mxu0 %v1156
  %v1158 = vpop.f32.mrb[0].mxu0
  %v1159 = vadd.f32 %v969, %v1158
  %v1160 = vpop.f32.mrb[0].mxu0
  %1161 = vmatprep.mubr.f32.mxu0 0.0
  %v1162 = vand.u32 %v170, 4294901760
  %1163 = vmatmul.mubr.f32.gmra.mrb[0].mxu0 %v1162
  %v1164 = vpop.f32.mrb[0].mxu0
  %v1165 = vadd.f32 %v977, %v1164
  %v1166 = vpop.f32.mrb[0].mxu0
  %1167 = vmatprep.mubr.f32.mxu0 0.0
  %v1168 = vand.u32 %v173, 4294901760
  %1169 = vmatmul.mubr.f32.gmra.mrb[0].mxu0 %v1168
  %v1170 = vpop.f32.mrb[0].mxu0
  %v1171 = vadd.f32 %v985, %v1170
  %v1172 = vpop.f32.mrb[0].mxu0
  %1173 = vmatprep.mubr.f32.mxu0 0.0
  %v1174 = vand.u32 %v176, 4294901760
  %1175 = vmatmul.mubr.f32.gmra.mrb[0].mxu0 %v1174
  %v1176 = vpop.f32.mrb[0].mxu0
  %v1177 = vadd.f32 %v993, %v1176
  %v1178 = vpop.f32.mrb[0].mxu0
  %1179 = vmatprep.mubr.f32.mxu0 0.0
  %v1180 = vand.u32 %v179, 4294901760
  %1181 = vmatmul.mubr.f32.gmra.mrb[0].mxu0 %v1180
  %v1182 = vpop.f32.mrb[0].mxu0
  %v1183 = vadd.f32 %v1001, %v1182
  %v1184 = vpop.f32.mrb[0].mxu0
  %1185 = vdwg.mxu0
  %1186 = vmatprep.subr.mxu0 0.0
  %v1187 = vand.u32 %v125, 4294901760
  %1188 = vmatpush1.msra.mxu0 %v1187
  %1189 = vmatprep.subr.mxu0 0.0
  %v1190 = vand.u32 %v126, 4294901760
  %1191 = vmatpush1.msra.mxu0 %v1190
  %1192 = vmatprep.subr.mxu0 0.0
  %v1193 = vand.u32 %v127, 4294901760
  %1194 = vmatpush1.msra.mxu0 %v1193
  %1195 = vmatprep.subr.mxu0 0.0
  %v1196 = vand.u32 %v128, 4294901760
  %1197 = vmatpush1.msra.mxu0 %v1196
  %1198 = vmatprep.subr.mxu0 0.0
  %v1199 = vand.u32 %v129, 4294901760
  %1200 = vmatpush1.msra.mxu0 %v1199
  %1201 = vmatprep.subr.mxu0 0.0
  %v1202 = vand.u32 %v130, 4294901760
  %1203 = vmatpush1.msra.mxu0 %v1202
  %1204 = vmatprep.subr.mxu0 0.0
  %v1205 = vand.u32 %v183, 4294901760
  %1206 = vmatpush1.msra.mxu0 %v1205
  %1207 = vmatprep.subr.mxu0 0.0
  %1208 = vmatpush1.msra.mxu0 0.0
  %1209 = vmatprep.subr.mxu0 0.0
  %1210 = vmatpush1.msra.mxu0 0.0
  %1211 = vmatprep.subr.mxu0 0.0
  %1212 = vmatpush1.msra.mxu0 0.0
  %1213 = vmatprep.subr.mxu0 0.0
  %1214 = vmatpush1.msra.mxu0 0.0
  %1215 = vmatprep.subr.mxu0 0.0
  %1216 = vmatpush1.msra.mxu0 0.0
  %1217 = vmatprep.subr.mxu0 0.0
  %1218 = vmatpush1.msra.mxu0 0.0
  %1219 = vmatprep.subr.mxu0 0.0
  %1220 = vmatpush1.msra.mxu0 0.0
  %1221 = vmatprep.subr.mxu0 0.0
  %1222 = vmatpush1.msra.mxu0 0.0
  %1223 = vmatprep.subr.mxu0 0.0
  %1224 = vmatpush1.msra.mxu0 0.0
  %1225 = vmatprep.subr.mxu0 0.0
  %1226 = vmatpush1.msra.mxu0 0.0
  %1227 = vmatprep.subr.mxu0 0.0
  %1228 = vmatpush1.msra.mxu0 0.0
  %1229 = vmatprep.subr.mxu0 0.0
  %1230 = vmatpush1.msra.mxu0 0.0
  %1231 = vmatprep.subr.mxu0 0.0
  %1232 = vmatpush1.msra.mxu0 0.0
  %1233 = vmatprep.subr.mxu0 0.0
  %1234 = vmatpush1.msra.mxu0 0.0
  %1235 = vmatprep.subr.mxu0 0.0
  %1236 = vmatpush1.msra.mxu0 0.0
  %1237 = vmatprep.subr.mxu0 0.0
  %1238 = vmatpush1.msra.mxu0 0.0
  %1239 = vmatprep.subr.mxu0 0.0
  %1240 = vmatpush1.msra.mxu0 0.0
  %1241 = vmatprep.subr.mxu0 0.0
  %1242 = vmatpush1.msra.mxu0 0.0
  %1243 = vmatprep.subr.mxu0 0.0
  %1244 = vmatpush1.msra.mxu0 0.0
  %1245 = vmatprep.subr.mxu0 0.0
  %1246 = vmatpush1.msra.mxu0 0.0
  %1247 = vmatprep.subr.mxu0 0.0
  %1248 = vmatpush1.msra.mxu0 0.0
  %1249 = vmatprep.subr.mxu0 0.0
  %1250 = vmatpush1.msra.mxu0 0.0
  %1251 = vmatprep.subr.mxu0 0.0
  %1252 = vmatpush1.msra.mxu0 0.0
  %1253 = vmatprep.subr.mxu0 0.0
  %1254 = vmatpush1.msra.mxu0 0.0
  %1255 = vmatprep.subr.mxu0 0.0
  %1256 = vmatpush1.msra.mxu0 0.0
  %1257 = vmatprep.mubr.f32.mxu0 0.0
  %v1258 = vand.u32 %v134, 4294901760
  %1259 = vmatmul.mubr.f32.gmra.mrb[0].mxu0 %v1258
  %v1260 = vpop.f32.mrb[0].mxu0
  %v1261 = vadd.f32 %v1093, %v1260
  %v1262 = vpop.f32.mrb[0].mxu0
  %1263 = vmatprep.mubr.f32.mxu0 0.0
  %v1264 = vand.u32 %v137, 4294901760
  %1265 = vmatmul.mubr.f32.gmra.mrb[0].mxu0 %v1264
  %v1266 = vpop.f32.mrb[0].mxu0
  %v1267 = vadd.f32 %v1099, %v1266
  %v1268 = vpop.f32.mrb[0].mxu0
  %1269 = vmatprep.mubr.f32.mxu0 0.0
  %v1270 = vand.u32 %v140, 4294901760
  %1271 = vmatmul.mubr.f32.gmra.mrb[0].mxu0 %v1270
  %v1272 = vpop.f32.mrb[0].mxu0
  %v1273 = vadd.f32 %v1105, %v1272
  %v1274 = vpop.f32.mrb[0].mxu0
  %1275 = vmatprep.mubr.f32.mxu0 0.0
  %v1276 = vand.u32 %v143, 4294901760
  %1277 = vmatmul.mubr.f32.gmra.mrb[0].mxu0 %v1276
  %v1278 = vpop.f32.mrb[0].mxu0
  %v1279 = vadd.f32 %v1111, %v1278
  %v1280 = vpop.f32.mrb[0].mxu0
  %1281 = vmatprep.mubr.f32.mxu0 0.0
  %v1282 = vand.u32 %v146, 4294901760
  %1283 = vmatmul.mubr.f32.gmra.mrb[0].mxu0 %v1282
  %v1284 = vpop.f32.mrb[0].mxu0
  %v1285 = vadd.f32 %v1117, %v1284
  %v1286 = vpop.f32.mrb[0].mxu0
  %1287 = vmatprep.mubr.f32.mxu0 0.0
  %v1288 = vand.u32 %v149, 4294901760
  %1289 = vmatmul.mubr.f32.gmra.mrb[0].mxu0 %v1288
  %v1290 = vpop.f32.mrb[0].mxu0
  %v1291 = vadd.f32 %v1123, %v1290
  %v1292 = vpop.f32.mrb[0].mxu0
  %1293 = vmatprep.mubr.f32.mxu0 0.0
  %v1294 = vand.u32 %v152, 4294901760
  %1295 = vmatmul.mubr.f32.gmra.mrb[0].mxu0 %v1294
  %v1296 = vpop.f32.mrb[0].mxu0
  %v1297 = vadd.f32 %v1129, %v1296
  %v1298 = vpop.f32.mrb[0].mxu0
  %1299 = vmatprep.mubr.f32.mxu0 0.0
  %v1300 = vand.u32 %v155, 4294901760
  %1301 = vmatmul.mubr.f32.gmra.mrb[0].mxu0 %v1300
  %v1302 = vpop.f32.mrb[0].mxu0
  %v1303 = vadd.f32 %v1135, %v1302
  %v1304 = vpop.f32.mrb[0].mxu0
  %1305 = vmatprep.mubr.f32.mxu0 0.0
  %v1306 = vand.u32 %v158, 4294901760
  %1307 = vmatmul.mubr.f32.gmra.mrb[0].mxu0 %v1306
  %v1308 = vpop.f32.mrb[0].mxu0
  %v1309 = vadd.f32 %v1141, %v1308
  %v1310 = vpop.f32.mrb[0].mxu0
  %1311 = vmatprep.mubr.f32.mxu0 0.0
  %v1312 = vand.u32 %v161, 4294901760
  %1313 = vmatmul.mubr.f32.gmra.mrb[0].mxu0 %v1312
  %v1314 = vpop.f32.mrb[0].mxu0
  %v1315 = vadd.f32 %v1147, %v1314
  %v1316 = vpop.f32.mrb[0].mxu0
  %1317 = vmatprep.mubr.f32.mxu0 0.0
  %v1318 = vand.u32 %v164, 4294901760
  %1319 = vmatmul.mubr.f32.gmra.mrb[0].mxu0 %v1318
  %v1320 = vpop.f32.mrb[0].mxu0
  %v1321 = vadd.f32 %v1153, %v1320
  %v1322 = vpop.f32.mrb[0].mxu0
  %1323 = vmatprep.mubr.f32.mxu0 0.0
  %v1324 = vand.u32 %v167, 4294901760
  %1325 = vmatmul.mubr.f32.gmra.mrb[0].mxu0 %v1324
  %v1326 = vpop.f32.mrb[0].mxu0
  %v1327 = vadd.f32 %v1159, %v1326
  %v1328 = vpop.f32.mrb[0].mxu0
  %1329 = vmatprep.mubr.f32.mxu0 0.0
  %v1330 = vand.u32 %v170, 4294901760
  %1331 = vmatmul.mubr.f32.gmra.mrb[0].mxu0 %v1330
  %v1332 = vpop.f32.mrb[0].mxu0
  %v1333 = vadd.f32 %v1165, %v1332
  %v1334 = vpop.f32.mrb[0].mxu0
  %1335 = vmatprep.mubr.f32.mxu0 0.0
  %v1336 = vand.u32 %v173, 4294901760
  %1337 = vmatmul.mubr.f32.gmra.mrb[0].mxu0 %v1336
  %v1338 = vpop.f32.mrb[0].mxu0
  %v1339 = vadd.f32 %v1171, %v1338
  %v1340 = vpop.f32.mrb[0].mxu0
  %1341 = vmatprep.mubr.f32.mxu0 0.0
  %v1342 = vand.u32 %v176, 4294901760
  %1343 = vmatmul.mubr.f32.gmra.mrb[0].mxu0 %v1342
  %v1344 = vpop.f32.mrb[0].mxu0
  %v1345 = vadd.f32 %v1177, %v1344
  %v1346 = vpop.f32.mrb[0].mxu0
  %1347 = vmatprep.mubr.f32.mxu0 0.0
  %v1348 = vand.u32 %v179, 4294901760
  %1349 = vmatmul.mubr.f32.gmra.mrb[0].mxu0 %v1348
  %v1350 = vpop.f32.mrb[0].mxu0
  %v1351 = vadd.f32 %v1183, %v1350
  %v1352 = vpop.f32.mrb[0].mxu0
  %1353 = vdwg.mxu0
  %vm1354 = vcmask 261120
  %1355 = vst.msk [vmem:[%s2] sm:$0xff] %vm1354, %v1261
  %1356 = vst.msk [vmem:[%s2 + $0x8] sm:$0xff] %vm1354, %v1267
  %1357 = vst.msk [vmem:[%s2 + $0x10] sm:$0xff] %vm1354, %v1273
  %1358 = vst.msk [vmem:[%s2 + $0x18] sm:$0xff] %vm1354, %v1279
  %1359 = vst.msk [vmem:[%s2 + $0x20] sm:$0xff] %vm1354, %v1285
  %1360 = vst.msk [vmem:[%s2 + $0x28] sm:$0xff] %vm1354, %v1291
  %1361 = vst.msk [vmem:[%s2 + $0x30] sm:$0xff] %vm1354, %v1297
  %1362 = vst.msk [vmem:[%s2 + $0x38] sm:$0xff] %vm1354, %v1303
  %1363 = vst.msk [vmem:[%s2 + $0x40] sm:$0xff] %vm1354, %v1309
  %1364 = vst.msk [vmem:[%s2 + $0x48] sm:$0xff] %vm1354, %v1315
  %1365 = vst.msk [vmem:[%s2 + $0x50] sm:$0xff] %vm1354, %v1321
  %1366 = vst.msk [vmem:[%s2 + $0x58] sm:$0xff] %vm1354, %v1327
  %1367 = vst.msk [vmem:[%s2 + $0x60] sm:$0xff] %vm1354, %v1333
  %1368 = vst.msk [vmem:[%s2 + $0x68] sm:$0xff] %vm1354, %v1339
  %1369 = vst.msk [vmem:[%s2 + $0x70] sm:$0xff] %vm1354, %v1345
  %1370 = vst.msk [vmem:[%s2 + $0x78] sm:$0xff] %vm1354, %v1351
  // Predicated region
  $region10: #{embedding_forward.1} parent=0 // pred_check
    _
  $region11: #{embedding_forward.1} parent=0 // pred_check_branch
    %1372 = sbr.rel (0) target = $region13
  $region12: #{embedding_forward.1} parent=0 // pred_region
    _
  $region13: #{embedding_forward.1} parent=0 // pred_fallthru
    _
  // Predicated region
  $region14: #{embedding_forward.1} parent=0 // pred_check
    _
  $region15: #{embedding_forward.1} parent=0 // pred_check_branch
    %1374 = sbr.rel (0) target = $region17
  $region16: #{embedding_forward.1} parent=0 // pred_region
    _
  $region17: #{embedding_forward.1} parent=0 // pred_fallthru
    _

</llo_original>
